<compile_context>
chip_gen: v6e
topology: v6e:2x2x1
jax: 0.10.0
libtpu: 0.0.40
codegen_flags: <defaults>
</compile_context>

<pallas_src>
import functools

import jax
import jax.numpy as jnp
from jax.experimental import pallas as pl
from jax.experimental.pallas import tpu as pltpu


def _actnorm_kernel(x_ref, bias_ref, scale_ref, out_ref, *, reverse):
    x = x_ref[...]          # (tm, tn) activation tile
    b = bias_ref[...]       # (tm, 1)  per-row bias
    s = scale_ref[...]      # (tm, 1)  per-row exp(+/-logs)
    if not reverse:
        # out = (x + bias) * exp(logs)
        out_ref[...] = ((x + b) * s).astype(out_ref.dtype)
    else:
        # out = x * exp(-logs) - bias
        out_ref[...] = (x * s - b).astype(out_ref.dtype)


@functools.partial(jax.jit, static_argnames=("reverse",))
def actnorm_forward(x, bias, logs, logdet=0.0, reverse=False):
    """ActNorm forward (matches RFN_vers7.ActNorm.forward).

    x    : (N, C, H, W)
    bias : (1, C, 1, 1)
    logs : (1, C, 1, 1)
    Returns (out (N, C, H, W), logdet).
    """
    N, C, H, W = x.shape
    HW = H * W
    NC = N * C
    itemsize = x.dtype.itemsize

    # --- per-channel params -> per-row (row = n*C + c) columns (tiny) -------
    bias_c = bias.reshape(C).astype(jnp.float32)
    logs_c = logs.reshape(C).astype(jnp.float32)
    scale_c = jnp.exp(-logs_c) if reverse else jnp.exp(logs_c)
    bias_rows = jnp.tile(bias_c, (N,)).reshape(NC, 1).astype(x.dtype)
    scale_rows = jnp.tile(scale_c, (N,)).reshape(NC, 1).astype(x.dtype)

    x2d = x.reshape(NC, HW)  # free reshape (contiguous NCHW)

    # --- tile selection ------------------------------------------------------
    # Lane axis: largest multiple of 128 (<= 2048) dividing HW -> unmasked,
    # lane-dense stores.  Full-extent block if HW % 128 != 0.
    if HW % 128 == 0:
        tn = 128
        for cand in range(min(HW, 2048), 127, -128):
            if HW % cand == 0:
                tn = cand
                break
    else:
        tn = HW

    # Row axis: multiple of 8, capped so one buffer <= ~4 MiB (plenty of grid
    # steps for the pipeline, well inside VMEM with double-buffered in + out).
    max_block_bytes = 4 * 1024 * 1024
    rows_cap = max(8, (max_block_bytes // (tn * itemsize)) // 8 * 8)
    if NC < 8:
        tm = NC                                   # full-extent row block
    else:
        tm = min(512, rows_cap, (NC // 8) * 8)    # multiple of 8; ragged tail ok

    grid = (pl.cdiv(NC, tm), HW // tn)

    kernel = functools.partial(_actnorm_kernel, reverse=bool(reverse))

    out2d = pl.pallas_call(
        kernel,
        grid=grid,
        in_specs=[
            pl.BlockSpec((tm, tn), lambda i, j: (i, j)),
            pl.BlockSpec((tm, 1), lambda i, j: (i, 0)),
            pl.BlockSpec((tm, 1), lambda i, j: (i, 0)),
        ],
        out_specs=pl.BlockSpec((tm, tn), lambda i, j: (i, j)),
        out_shape=jax.ShapeDtypeStruct((NC, HW), x.dtype),
        compiler_params=pltpu.CompilerParams(
            dimension_semantics=("parallel", "parallel"),
            vmem_limit_bytes=48 * 1024 * 1024,
        ),
    )(x2d, bias_rows, scale_rows)

    out = out2d.reshape(N, C, H, W)

    # logdet term: trivial reduction over C scalars -> plain XLA, static sign.
    dlogdet = jnp.sum(logs_c) * float(HW)
    if reverse:
        dlogdet = -dlogdet
    return out, logdet + dlogdet


if __name__ == "__main__":
    key = jax.random.PRNGKey(0)
    k1, k2, k3 = jax.random.split(key, 3)

    N, C, H, W = 2, 4, 16, 16
    x = jax.random.normal(k1, (N, C, H, W), dtype=jnp.float32)
    # Parameters as in __init__: normal(mean=0, std=0.05), shape [1, C, 1, 1]
    bias = 0.05 * jax.random.normal(k2, (1, C, 1, 1), dtype=jnp.float32)
    logs = 0.05 * jax.random.normal(k3, (1, C, 1, 1), dtype=jnp.float32)

    out, logdet = actnorm_forward(x, bias, logs, logdet=0.0, reverse=False)
    out = jax.block_until_ready(out)
    logdet = jax.block_until_ready(logdet)

    # reference check (plain JAX)
    ref_out = (x + bias) * jnp.exp(logs)
    ref_logdet = jnp.sum(logs) * (H * W)
    assert jnp.allclose(out, ref_out, atol=1e-6, rtol=1e-6)
    assert jnp.allclose(logdet, ref_logdet, atol=1e-5, rtol=1e-5)

    # also exercise the reverse branch once
    inv, logdet_r = actnorm_forward(out, bias, logs, logdet=logdet, reverse=True)
    inv = jax.block_until_ready(inv)
    assert jnp.allclose(inv, x, atol=1e-5, rtol=1e-5)
    assert jnp.allclose(logdet_r, 0.0, atol=1e-5)

    print("KERNEL_OK")
</pallas_src>

<mosaic_0001>
module attributes {stable_mosaic.version = 11 : i64} {
  func.func @_actnorm_kernel(%arg0: i32, %arg1: i32, %arg2: memref<8x256xf32, #tpu.memory_space<vmem>>, %arg3: memref<8x1xf32, #tpu.memory_space<vmem>>, %arg4: memref<8x1xf32, #tpu.memory_space<vmem>>, %arg5: memref<8x256xf32, #tpu.memory_space<vmem>>) attributes {dimension_semantics = [#tpu.dimension_semantics<parallel>, #tpu.dimension_semantics<parallel>], iteration_bounds = array<i64: 1, 1>, scalar_prefetch = 0 : i64, scratch_operands = 0 : i64, tpu.core_type = #tpu.core_type<tc>, window_params = [{transform_indices = @transform_0, window_bounds = array<i64: 8, 256>}, {transform_indices = @transform_1, window_bounds = array<i64: 8, 1>}, {transform_indices = @transform_2, window_bounds = array<i64: 8, 1>}, {transform_indices = @transform_3, window_bounds = array<i64: 8, 256>}]} {
    %c0 = arith.constant 0 : index
    %c0_0 = arith.constant 0 : index
    %0 = vector.load %arg2[%c0, %c0_0] : memref<8x256xf32, #tpu.memory_space<vmem>>, vector<8x256xf32>
    %c0_1 = arith.constant 0 : index
    %c0_2 = arith.constant 0 : index
    %1 = vector.load %arg3[%c0_1, %c0_2] : memref<8x1xf32, #tpu.memory_space<vmem>>, vector<8x1xf32>
    %c0_3 = arith.constant 0 : index
    %c0_4 = arith.constant 0 : index
    %2 = vector.load %arg4[%c0_3, %c0_4] : memref<8x1xf32, #tpu.memory_space<vmem>>, vector<8x1xf32>
    %3 = vector.broadcast %1 : vector<8x1xf32> to vector<8x256xf32>
    %4 = arith.addf %0, %3 : vector<8x256xf32>
    %5 = vector.broadcast %2 : vector<8x1xf32> to vector<8x256xf32>
    %6 = arith.mulf %4, %5 : vector<8x256xf32>
    %c0_5 = arith.constant 0 : index
    %c0_6 = arith.constant 0 : index
    %7 = vector.load %arg5[%c0_5, %c0_6] : memref<8x256xf32, #tpu.memory_space<vmem>>, vector<8x256xf32>
    tpu.vector_store %arg5[%c0_5, %c0_6], %6 {strides = array<i32>} : memref<8x256xf32, #tpu.memory_space<vmem>>, vector<8x256xf32>,
    return
  }
  func.func @transform_0(%arg0: i32, %arg1: i32) -> (i32, i32) {
    %c0_i32 = arith.constant 0 : i32
    return %arg0, %arg1 : i32, i32
  }
  func.func @transform_1(%arg0: i32, %arg1: i32) -> (i32, i32) {
    %c0_i32 = arith.constant 0 : i32
    %c0_i32_0 = arith.constant 0 : i32
    return %arg0, %c0_i32 : i32, i32
  }
  func.func @transform_2(%arg0: i32, %arg1: i32) -> (i32, i32) {
    %c0_i32 = arith.constant 0 : i32
    %c0_i32_0 = arith.constant 0 : i32
    return %arg0, %c0_i32 : i32, i32
  }
  func.func @transform_3(%arg0: i32, %arg1: i32) -> (i32, i32) {
    %c0_i32 = arith.constant 0 : i32
    return %arg0, %arg1 : i32, i32
  }
}

</mosaic_0001>

<llo_original>
// kernel: tile.1
$region0: #{tile.1}
  %s0 = inlined_call_operand.vmem [shape: f32[2,4], index: 0, kind: input, shape index: {}]
  %s1 = inlined_call_operand.vmem [shape: f32[8,1], index: 1, kind: output, shape index: {}]
  $region1: #{tile.1} parent=0
    #allocation0 [shape = 'u8[4096]{0}', space=vmem, size = 0x1000, scoped, tag = 'scoped mem for input reshape']
    %s3 = sshll.u32 1, 2
    %s4 = ssub.s32 %s3, 1
    %v5 = vld [vmem:[%s0] sm:%s4]
    %6 = vst [vmem:[#allocation0] sm:%s4] %v5
    %v7 = vld [vmem:[#allocation0] sm:$0x3]
    %vm8 = vcmask 7168
    %9 = vst.msk [vmem:[%s1] ss:$4 sm:$0x3] %vm8, %v7
    %v10 = vld [vmem:[#allocation0] sm:$0x3]
    %11 = vrot.lane.b32.xlu0 %v10, 127
    %v12 = vpop.permute.xlu0 %11
    %vm13 = vcmask 7168
    %s14 = scalar_lea.vmem %s1, 1
    %15 = vst.msk [vmem:[%s14] ss:$4 sm:$0x3] %vm13, %v12
    %v16 = vld [vmem:[#allocation0] sm:$0x3]
    %17 = vrot.lane.b32.xlu0 %v16, 126
    %v18 = vpop.permute.xlu0 %17
    %vm19 = vcmask 7168
    %s20 = scalar_lea.vmem %s1, 2
    %21 = vst.msk [vmem:[%s20] ss:$4 sm:$0x3] %vm19, %v18
    %v22 = vld [vmem:[#allocation0] sm:$0x3]
    %23 = vrot.lane.b32.xlu0 %v22, 125
    %v24 = vpop.permute.xlu0 %23
    %vm25 = vcmask 7168
    %s26 = scalar_lea.vmem %s1, 3
    %27 = vst.msk [vmem:[%s26] ss:$4 sm:$0x3] %vm25, %v24

// kernel: tile.11
$region0: #{tile.11}
  #allocation0 [shape = 's32[1]{0}', space=sflag, size = 0x4, scoped, tag = 'scoped memory for tile.11']
  %s0 = inlined_call_operand.vmem [shape: f32[4], index: 0, kind: input, shape index: {}]
  %s1 = inlined_call_operand.vmem [shape: f32[2,4], index: 1, kind: output, shape index: {}]
  // Predicated region
  $region2: #{tile.11} parent=0 // pred_check
    _
  $region3: #{tile.11} parent=0 // pred_check_branch
    %3 = sbr.rel (0) target = $region5
  $region4: #{tile.11} parent=0 // pred_region
    _
  $region5: #{tile.11} parent=0 // pred_fallthru
    _
  %v4 = vld [vmem:[%s0] ss:$0 sm:$0xff]
  %5 = vst [vmem:[%s1] sm:$0x3] %v4

// kernel: actnorm_forward.1
$region0: #{actnorm_forward.1}
  #allocation0 [shape = 'u32[]', space=smem, size = 0x4, offset = 0x4, fixed_abs, tag = 'smem constant byte address 0x4 - core index']
  #allocation1 [shape = 'u32[144,128]{1,0:T(1,128)}', space=vmem, size = 0x12000, scoped, tag = 'internal scratch']
  %s0 = inlined_call_operand.vmem [shape: f32[8,256], index: 0, kind: input, shape index: {}]
  %s1 = inlined_call_operand.vmem [shape: f32[8,1], index: 1, kind: input, shape index: {}]
  %s2 = inlined_call_operand.vmem [shape: f32[8,1], index: 2, kind: input, shape index: {}]
  %s3 = inlined_call_operand.vmem [shape: f32[8,256], index: 3, kind: output, shape index: {}]
  %s4 = sld [smem:[#allocation0]]
  $region22: #{actnorm_forward.1} parent=0
    _
  %s6 = ssub.s32 1, %s4
  %s7 = scalar_select 0, %s6, %s4
  // Predicated region
  $region2: #{actnorm_forward.1} parent=0 // pred_check
    _
  $region3: #{actnorm_forward.1} parent=0 // pred_check_branch
    %9 = sbr.rel (0) target = $region5
  $region4: #{actnorm_forward.1} parent=0 // pred_region
    _
  $region5: #{actnorm_forward.1} parent=0 // pred_fallthru
    _
  // Predicated region
  $region6: #{actnorm_forward.1} parent=0 // pred_check
    _
  $region7: #{actnorm_forward.1} parent=0 // pred_check_branch
    %11 = sbr.rel (0) target = $region9
  $region8: #{actnorm_forward.1} parent=0 // pred_region
    _
  $region9: #{actnorm_forward.1} parent=0 // pred_fallthru
    _
  // Predicated region
  $region10: #{actnorm_forward.1} parent=0 // pred_check
    _
  $region11: #{actnorm_forward.1} parent=0 // pred_check_branch
    %13 = sbr.rel (0) target = $region13
  $region12: #{actnorm_forward.1} parent=0 // pred_region
    _
  $region13: #{actnorm_forward.1} parent=0 // pred_fallthru
    _
  %v14 = vld [vmem:[%s0] sm:$0xff]
  %v15 = vld [vmem:[%s0 + $0x8] sm:$0xff]
  %v16 = vld [vmem:[%s1] sm:$0xff]
  %v17 = vld [vmem:[%s2] sm:$0xff]
  %19 = vset.pattern.permute.xlu0 0
  %20 = vperm.xlu0 %19, %v16
  %v21 = vpop.permute.xlu0 %20
  %v23 = vadd.f32 %v14, %v21
  %v24 = vadd.f32 %v15, %v21
  %26 = vset.pattern.permute.xlu0 0
  %27 = vperm.xlu0 %26, %v17
  %v28 = vpop.permute.xlu0 %27
  %v30 = vmul.f32 %v23, %v28
  %v31 = vmul.f32 %v24, %v28
  %32 = vst [vmem:[%s3] sm:$0xff] %v30
  %33 = vst [vmem:[%s3 + $0x8] sm:$0xff] %v31
  // Predicated region
  $region14: #{actnorm_forward.1} parent=0 // pred_check
    _
  $region15: #{actnorm_forward.1} parent=0 // pred_check_branch
    %35 = sbr.rel (0) target = $region17
  $region16: #{actnorm_forward.1} parent=0 // pred_region
    _
  $region17: #{actnorm_forward.1} parent=0 // pred_fallthru
    _
  // Predicated region
  $region18: #{actnorm_forward.1} parent=0 // pred_check
    _
  $region19: #{actnorm_forward.1} parent=0 // pred_check_branch
    %37 = sbr.rel (0) target = $region21
  $region20: #{actnorm_forward.1} parent=0 // pred_region
    _
  $region21: #{actnorm_forward.1} parent=0 // pred_fallthru
    _

</llo_original>
